<compile_context>
chip_gen: v6e
topology: v6e:2x2x1
jax: 0.10.0
libtpu: 0.0.40
codegen_flags: <defaults>
</compile_context>

<pallas_src>
from typing import NamedTuple

import jax
import jax.numpy as jnp
from jax.experimental import pallas as pl
from jax.experimental.pallas import tpu as pltpu


def _round_up(x: int, m: int) -> int:
    return (x + m - 1) // m * m


# ---------------------------------------------------------------------------
# Kernel: one chunk of Nc lane-packed candidates per grid step.
# ---------------------------------------------------------------------------
def _make_packed_mlp_kernel(kp: int, nh: int, a_out: int):
    """kp: padded obs size (sublane dim of W1); nh: padded Nc*hidden lanes;
    a_out: Nc*actions output lanes. All static => zero-cost ref slices."""
    r_w2 = kp            # W2 block rows start (kp is a multiple of 8)
    r_bias = kp + nh     # bias rows start (multiple of 8)

    def kernel(x_ref, slab_ref, out_ref):
        # x_ref   : [B, kp]        shared across the whole grid (VMEM-resident)
        # slab_ref: [R, L]         fused per-chunk parameter slab (1 DMA/step)
        # out_ref : [B, a_out]     lane-packed actions for this chunk
        x = x_ref[...]
        w1 = slab_ref[0:kp, 0:nh]                       # [kp, nh]
        w2 = slab_ref[r_w2:r_w2 + nh, 0:a_out]          # [nh, a_out] block-diag
        b1 = slab_ref[r_bias:r_bias + 1, 0:nh]          # [1, nh]
        b2 = slab_ref[r_bias + 1:r_bias + 2, 0:a_out]   # [1, a_out]

        # Layer 1 (MXU, f32 accumulation) -> bias/ReLU in f32 (v5e-safe VPU).
        h = jnp.dot(x, w1, preferred_element_type=jnp.float32)
        h = jnp.maximum(h + b1.astype(jnp.float32), 0.0)

        # Layer 2: block-diagonal matmul keeps candidates independent.
        o = jnp.dot(h.astype(w2.dtype), w2, preferred_element_type=jnp.float32)
        o = o + b2.astype(jnp.float32)
        out_ref[...] = jnp.tanh(o).astype(out_ref.dtype)   # tanh on EUP, f32

    return kernel


# ---------------------------------------------------------------------------
# Generation-time packing (run ONCE per ES generation, not per rollout step).
# ---------------------------------------------------------------------------
class PackedPolicyParams(NamedTuple):
    slab: jax.Array      # [n_chunks, R, L] fused per-chunk parameter slab
    population: int
    obs_size: int
    hidden: int
    actions: int
    nc: int              # candidates per chunk (lane-packed)
    kp: int              # round_up(obs_size, 8)
    nh: int              # round_up(nc*hidden, 8)
    a_out: int           # nc*actions (packed output lane width)


def pack_population_params(w1, b1, w2, b2, *, candidates_per_chunk=None,
                           param_dtype=jnp.float32) -> PackedPolicyParams:
    """Pack P candidate parameter sets into lane-packed, block-diagonal slabs.

    w1: [P, obs, hidden]  (torch Linear weight, transposed to in x out)
    b1: [P, hidden]
    w2: [P, hidden, actions]
    b2: [P, actions]
    """
    P, K, H = w1.shape
    A = w2.shape[2]
    # Default: 128 packed hidden lanes (v5e MXU pass width). Use 16 (=256
    # lanes for hidden=16) on v6e / v7x to fill a 256-wide MXU pass.
    nc = candidates_per_chunk if candidates_per_chunk else max(1, 128 // H)
    n_chunks = -(-P // nc)
    Pp = n_chunks * nc

    kp = _round_up(K, 8)
    nh = _round_up(nc * H, 8)
    a_out = nc * A
    L = max(nh, a_out)
    R = kp + nh + 8          # W1 rows | W2 rows | bias rows (8-row block)

    f32 = jnp.float32
    w1 = w1.astype(f32); b1 = b1.astype(f32)
    w2 = w2.astype(f32); b2 = b2.astype(f32)
    if Pp != P:  # pad population with zero candidates (outputs tanh(0)=0, dropped)
        w1 = jnp.pad(w1, ((0, Pp - P), (0, 0), (0, 0)))
        b1 = jnp.pad(b1, ((0, Pp - P), (0, 0)))
        w2 = jnp.pad(w2, ((0, Pp - P), (0, 0), (0, 0)))
        b2 = jnp.pad(b2, ((0, Pp - P), (0, 0)))

    w1c = w1.reshape(n_chunks, nc, K, H)
    b1c = b1.reshape(n_chunks, nc, H)
    w2c = w2.reshape(n_chunks, nc, H, A)
    b2c = b2.reshape(n_chunks, nc, A)

    # Layer 1: lane-concatenate candidates -> [n_chunks, K, nc*H]
    w1p = jnp.transpose(w1c, (0, 2, 1, 3)).reshape(n_chunks, K, nc * H)
    b1p = b1c.reshape(n_chunks, nc * H)

    # Layer 2: block-diagonal [nc*H, nc*A] so candidates stay independent.
    eye = jnp.eye(nc, dtype=f32)
    w2bd = jnp.einsum('ncha,cd->nchda', w2c, eye).reshape(n_chunks, nc * H, nc * A)
    b2p = b2c.reshape(n_chunks, nc * A)

    slab = jnp.zeros((n_chunks, R, L), f32)
    slab = slab.at[:, 0:K, 0:nc * H].set(w1p)
    slab = slab.at[:, kp:kp + nc * H, 0:a_out].set(w2bd)
    slab = slab.at[:, kp + nh, 0:nc * H].set(b1p)
    slab = slab.at[:, kp + nh + 1, 0:a_out].set(b2p)
    slab = slab.astype(param_dtype)   # bf16 halves weight DMA; keep ES master params f32

    return PackedPolicyParams(slab=slab, population=P, obs_size=K, hidden=H,
                              actions=A, nc=nc, kp=kp, nh=nh, a_out=a_out)


# ---------------------------------------------------------------------------
# Hot path: one pallas_call, grid over candidate chunks.
# ---------------------------------------------------------------------------
def neural_network_policy_forward_packed(observation, packed: PackedPolicyParams):
    """observation: [B, obs_size] -> packed actions [n_chunks, B, nc*actions]."""
    B, K = observation.shape
    assert K == packed.obs_size
    x = observation.astype(packed.slab.dtype)
    if packed.kp != K:                       # tiny sublane pad, per-call
        x = jnp.pad(x, ((0, 0), (0, packed.kp - K)))

    n_chunks, R, L = packed.slab.shape
    kernel = _make_packed_mlp_kernel(packed.kp, packed.nh, packed.a_out)

    return pl.pallas_call(
        kernel,
        out_shape=jax.ShapeDtypeStruct((n_chunks, B, packed.a_out), jnp.float32),
        grid=(n_chunks,),
        in_specs=[
            # Shared observation: constant block index -> stays VMEM-resident.
            pl.BlockSpec((B, packed.kp), lambda c: (0, 0)),
            # One fused parameter slab per chunk (single DMA per grid step).
            pl.BlockSpec((None, R, L), lambda c: (c, 0, 0)),
        ],
        out_specs=pl.BlockSpec((None, B, packed.a_out), lambda c: (c, 0, 0)),
        compiler_params=pltpu.CompilerParams(
            dimension_semantics=("parallel",),   # v7x: shard chunks across both TCs
        ),
    )(x, packed.slab)


def unpack_population_actions(packed_out, packed: PackedPolicyParams):
    """[n_chunks, B, nc*actions] -> [P, B, actions] (outside the hot path)."""
    n_chunks, B, _ = packed_out.shape
    out = packed_out.reshape(n_chunks, B, packed.nc, packed.actions)
    out = jnp.transpose(out, (0, 2, 1, 3)).reshape(n_chunks * packed.nc, B,
                                                   packed.actions)
    return out[:packed.population]


# ---------------------------------------------------------------------------
# Convenience wrappers (module-equivalent semantics).
# ---------------------------------------------------------------------------
def neural_network_policy_forward_population(observation, w1, b1, w2, b2, *,
                                              candidates_per_chunk=None,
                                              param_dtype=jnp.float32):
    packed = pack_population_params(w1, b1, w2, b2,
                                    candidates_per_chunk=candidates_per_chunk,
                                    param_dtype=param_dtype)
    out = neural_network_policy_forward_packed(observation, packed)
    return unpack_population_actions(out, packed)


def neural_network_policy_forward(observation, w1, b1, w2, b2):
    """Single-candidate forward, equivalent to NeuralNetworkPolicy.forward."""
    return neural_network_policy_forward_population(
        observation, w1[None], b1[None], w2[None], b2[None])[0]


def _reference_forward(observation, w1, b1, w2, b2):
    h = jnp.maximum(observation @ w1 + b1, 0.0)
    return jnp.tanh(h @ w2 + b2)


if __name__ == "__main__":
    batch = 8
    observations_size = 12
    hidden_size = 16
    actions_size = 4
    population = 16            # (1+1)-SAES candidate parameter sets per call

    key = jax.random.PRNGKey(0)
    k_x, k_w1, k_b1, k_w2, k_b2 = jax.random.split(key, 5)

    observation = jax.random.normal(k_x, (batch, observations_size), jnp.float32)

    s1 = 1.0 / jnp.sqrt(observations_size)
    s2 = 1.0 / jnp.sqrt(hidden_size)
    w1 = jax.random.uniform(k_w1, (population, observations_size, hidden_size),
                            jnp.float32, -s1, s1)
    b1 = jax.random.uniform(k_b1, (population, hidden_size), jnp.float32, -s1, s1)
    w2 = jax.random.uniform(k_w2, (population, hidden_size, actions_size),
                            jnp.float32, -s2, s2)
    b2 = jax.random.uniform(k_b2, (population, actions_size), jnp.float32, -s2, s2)

    ref_pop = jax.vmap(
        lambda a, c, d, e: _reference_forward(observation, a, c, d, e)
    )(w1, b1, w2, b2)

    # --- f32 path: pack once per generation, lane-packed kernel, tight check.
    packed = pack_population_params(w1, b1, w2, b2, candidates_per_chunk=8)
    out_packed = jax.block_until_ready(
        neural_network_policy_forward_packed(observation, packed))
    out_pop = unpack_population_actions(out_packed, packed)
    assert out_pop.shape == (population, batch, actions_size)
    assert jnp.allclose(out_pop, ref_pop, atol=1e-5, rtol=1e-5), "f32 population mismatch"

    # --- bf16 parameter-transfer path (halves weight DMA); f32 post-MXU math.
    packed_bf16 = pack_population_params(w1, b1, w2, b2, candidates_per_chunk=8,
                                         param_dtype=jnp.bfloat16)
    out_bf16 = unpack_population_actions(
        jax.block_until_ready(
            neural_network_policy_forward_packed(observation, packed_bf16)),
        packed_bf16)
    assert jnp.allclose(out_bf16, ref_pop, atol=5e-2, rtol=0.0), "bf16 population mismatch"

    # --- Single-candidate path (module-equivalent forward; also exercises
    #     population padding to a full chunk).
    out_one = jax.block_until_ready(
        neural_network_policy_forward(observation, w1[0], b1[0], w2[0], b2[0]))
    ref_one = _reference_forward(observation, w1[0], b1[0], w2[0], b2[0])
    assert out_one.shape == (batch, actions_size)
    assert jnp.allclose(out_one, ref_one, atol=1e-5, rtol=1e-5), "single mismatch"

    print("KERNEL_OK")
</pallas_src>

<mosaic_0001>
module attributes {stable_mosaic.version = 11 : i64} {
  func.func @kernel(%arg0: i32, %arg1: memref<8x16xf32, #tpu.memory_space<vmem>>, %arg2: memref<1x152x128xf32, #tpu.memory_space<vmem>>, %arg3: memref<1x8x32xf32, #tpu.memory_space<vmem>>) attributes {dimension_semantics = [#tpu.dimension_semantics<parallel>], iteration_bounds = array<i64: 2>, scalar_prefetch = 0 : i64, scratch_operands = 0 : i64, tpu.core_type = #tpu.core_type<tc>, window_params = [{pipeline_mode = #tpu.pipeline_mode<synchronous>, transform_indices = @transform_0, window_bounds = array<i64: 8, 16>}, {transform_indices = @transform_1, window_bounds = array<i64: 1, 152, 128>}, {transform_indices = @transform_2, window_bounds = array<i64: 1, 8, 32>}]} {
    %c0 = arith.constant 0 : index
    %c0_0 = arith.constant 0 : index
    %0 = vector.load %arg1[%c0, %c0_0] : memref<8x16xf32, #tpu.memory_space<vmem>>, vector<8x16xf32>
    %c0_1 = arith.constant 0 : index
    %c0_2 = arith.constant 0 : index
    %c0_3 = arith.constant 0 : index
    %1 = vector.load %arg2[%c0_1, %c0_2, %c0_3] : memref<1x152x128xf32, #tpu.memory_space<vmem>>, vector<1x16x128xf32>
    %2 = vector.shape_cast %1 : vector<1x16x128xf32> to vector<16x128xf32>
    %c0_4 = arith.constant 0 : index
    %c16 = arith.constant 16 : index
    %c0_5 = arith.constant 0 : index
    %3 = vector.load %arg2[%c0_4, %c16, %c0_5] : memref<1x152x128xf32, #tpu.memory_space<vmem>>, vector<1x128x32xf32>
    %4 = vector.shape_cast %3 : vector<1x128x32xf32> to vector<128x32xf32>
    %c0_6 = arith.constant 0 : index
    %c144 = arith.constant 144 : index
    %c0_7 = arith.constant 0 : index
    %5 = vector.load %arg2[%c0_6, %c144, %c0_7] : memref<1x152x128xf32, #tpu.memory_space<vmem>>, vector<1x1x128xf32>
    %6 = vector.shape_cast %5 : vector<1x1x128xf32> to vector<1x128xf32>
    %c0_8 = arith.constant 0 : index
    %c145 = arith.constant 145 : index
    %c0_9 = arith.constant 0 : index
    %7 = vector.load %arg2[%c0_8, %c145, %c0_9] : memref<1x152x128xf32, #tpu.memory_space<vmem>>, vector<1x1x32xf32>
    %8 = vector.shape_cast %7 : vector<1x1x32xf32> to vector<1x32xf32>
    %cst = arith.constant dense<0.000000e+00> : vector<8x128xf32>
    %9 = tpu.matmul %0, %2, %cst {dimension_numbers = #tpu.dot_dimension_numbers<[1], [0], [0], [1], [0, 0, 1, 1], [], []>} : vector<8x16xf32>, vector<16x128xf32>, vector<8x128xf32> -> vector<8x128xf32>
    %10 = vector.broadcast %6 : vector<1x128xf32> to vector<8x128xf32>
    %11 = arith.addf %9, %10 : vector<8x128xf32>
    %cst_10 = arith.constant 0.000000e+00 : f32
    %12 = vector.broadcast %cst_10 : f32 to vector<8x128xf32>
    %13 = arith.maximumf %11, %12 : vector<8x128xf32>
    %cst_11 = arith.constant dense<0.000000e+00> : vector<8x32xf32>
    %14 = tpu.matmul %13, %4, %cst_11 {dimension_numbers = #tpu.dot_dimension_numbers<[1], [0], [0], [1], [0, 0, 1, 1], [], []>} : vector<8x128xf32>, vector<128x32xf32>, vector<8x32xf32> -> vector<8x32xf32>
    %15 = vector.broadcast %8 : vector<1x32xf32> to vector<8x32xf32>
    %16 = arith.addf %14, %15 : vector<8x32xf32>
    %17 = math.tanh %16 : vector<8x32xf32>
    %c0_12 = arith.constant 0 : index
    %c0_13 = arith.constant 0 : index
    %c0_14 = arith.constant 0 : index
    %18 = vector.load %arg3[%c0_12, %c0_13, %c0_14] : memref<1x8x32xf32, #tpu.memory_space<vmem>>, vector<1x8x32xf32>
    %19 = vector.shape_cast %18 : vector<1x8x32xf32> to vector<8x32xf32>
    %20 = vector.shape_cast %17 : vector<8x32xf32> to vector<1x8x32xf32>
    tpu.vector_store %arg3[%c0_12, %c0_13, %c0_14], %20 {strides = array<i32>} : memref<1x8x32xf32, #tpu.memory_space<vmem>>, vector<1x8x32xf32>,
    return
  }
  func.func @transform_0(%arg0: i32) -> (i32, i32) {
    %c0_i32 = arith.constant 0 : i32
    %c0_i32_0 = arith.constant 0 : i32
    %c0_i32_1 = arith.constant 0 : i32
    return %c0_i32, %c0_i32_0 : i32, i32
  }
  func.func @transform_1(%arg0: i32) -> (i32, i32, i32) {
    %c0_i32 = arith.constant 0 : i32
    %c0_i32_0 = arith.constant 0 : i32
    %c0_i32_1 = arith.constant 0 : i32
    return %arg0, %c0_i32, %c0_i32_0 : i32, i32, i32
  }
  func.func @transform_2(%arg0: i32) -> (i32, i32, i32) {
    %c0_i32 = arith.constant 0 : i32
    %c0_i32_0 = arith.constant 0 : i32
    %c0_i32_1 = arith.constant 0 : i32
    return %arg0, %c0_i32, %c0_i32_0 : i32, i32, i32
  }
}

</mosaic_0001>

<llo_original>
// kernel: tpu_custom_call.1
$region0: #{tpu_custom_call.1}
  #allocation0 [shape = 'u32[]', space=smem, size = 0x4, offset = 0x4, fixed_abs, tag = 'smem constant byte address 0x4 - core index']
  #allocation1 [shape = 'u32[144,128]{1,0:T(1,128)}', space=vmem, size = 0x12000, scoped, tag = 'internal scratch']
  %s0 = inlined_call_operand.hbm [shape: f32[8,16], index: 0, kind: input, shape index: {}]
  %s1 = inlined_call_operand.hbm [shape: f32[2,152,128], index: 1, kind: input, shape index: {}]
  %s2 = inlined_call_operand.hbm [shape: f32[2,8,32], index: 2, kind: output, shape index: {}]
  %s3 = sld [smem:[#allocation0]]
  $region49: #{tpu_custom_call.1} parent=0
    _
  %s5 = ssub.s32 1, %s3
  %s6 = scalar_select 0, %s5, %s3
  $region1: #{tpu_custom_call.1} parent=0
    #allocation2 [shape = 'u8[4096]{0}', space=vmem, size = 0x1000, scoped, tag = 'input window, operand 0, single buffered']
    #allocation3 [shape = 's32[2]{0}', space=sflag, size = 0x8, scoped, tag = 'scoped memory for tpu_custom_call.1']
    #allocation4 [shape = 's32[2]{0}', space=sflag, size = 0x8, scoped, tag = 'scoped memory for tpu_custom_call.1']
    #allocation5 [shape = 'u8[155648]{0}', space=vmem, size = 0x26000, scoped, tag = 'input window, operand 1']
    #allocation6 [shape = 's32[2]{0}', space=sflag, size = 0x8, scoped, tag = 'scoped memory for tpu_custom_call.1']
    #allocation7 [shape = 'u8[8192]{0}', space=vmem, size = 0x2000, scoped, tag = 'output window, operand 0']
    %7 = vsyncpa [#allocation3], 0
    %8 = vsyncpa [#allocation6], 0
    %s9 = scalar_lea.sflag [#allocation6], 1
    %10 = vsyncpa %s9, 0
    %11 = vsyncpa [#allocation4], 0
    %s12 = scalar_lea.sflag [#allocation4], 1
    %13 = vsyncpa %s12, 0
    loop: start=0, step=1, limit=4
    $region2: #{tpu_custom_call.1} parent=1 // loop_pre_header
      _
    $region3: #{tpu_custom_call.1} parent=1 // loop_header
      %s15 = sphi 0, %s19
      %p16 = scmp.ge.s32.totalorder %s15, 4
      %s23 = sphi 0, %s23
      %s25 = sphi 0, %s23
      %s26 = sphi 0, %s25
      %s40 = sphi 0, %s26
      %s46 = sphi 0, %s48
      %s49 = sphi 0, %s46
      %s50 = sphi 0, %s49
      %s66 = sphi 0, %s50
      %s72 = sphi 0, %s74
      %s75 = sphi 0, %s72
      %s76 = sphi 0, %s75
      %s92 = sphi 0, %s76
    $region4: #{tpu_custom_call.1} parent=1 // loop_header_branch
      %18 = sbr.rel (%p16) target = $region8
    $region5: #{tpu_custom_call.1} parent=1 // loop_body
      %s20 = ssub.s32 %s15, 1
      %s21 = ssub.s32 %s15, 2
      %s22 = sadd.s32 %s15, 1
      %s24 = sadd.s32 %s23, 1
      %p27 = scmp.eq.s32.totalorder %s15, 1
      %p28 = scmp.ne.s32.totalorder %s23, %s25
      %p29 = scmp.eq.s32.totalorder %s15, 0
      %p30 = por %p28, %p29
      %p31 = scmp.ne.s32.totalorder %s23, %s25
      %p32 = scmp.eq.s32.totalorder %s20, 1
      %p33 = por %p31, %p32
      %p34 = scmp.ne.s32.totalorder %s25, %s26
      %p35 = scmp.eq.s32.totalorder %s20, 0
      %p36 = por %p34, %p35
      %p37 = scmp.ne.s32.totalorder %s25, %s26
      %p38 = scmp.eq.s32.totalorder %s21, 1
      %p39 = por %p37, %p38
      %p41 = scmp.ne.s32.totalorder %s26, %s40
      %p42 = scmp.eq.s32.totalorder %s21, 0
      %p43 = por %p41, %p42
      %s44 = ssub.s32 %s15, %s22
      %p45 = scmp.eq.s32.totalorder %s44, 0
      %s47 = sadd.s32 %s46, 1
      %s48 = scalar_select %p45, %s46, %s47
      %p51 = pneg %p45
      %p52 = scmp.eq.s32.totalorder %s15, 1
      %p53 = por %p51, %p52
      %p54 = scmp.ne.s32.totalorder %s46, %s49
      %p55 = scmp.eq.s32.totalorder %s15, 0
      %p56 = por %p54, %p55
      %p57 = scmp.ne.s32.totalorder %s46, %s49
      %p58 = scmp.eq.s32.totalorder %s20, 1
      %p59 = por %p57, %p58
      %p60 = scmp.ne.s32.totalorder %s49, %s50
      %p61 = scmp.eq.s32.totalorder %s20, 0
      %p62 = por %p60, %p61
      %p63 = scmp.ne.s32.totalorder %s49, %s50
      %p64 = scmp.eq.s32.totalorder %s21, 1
      %p65 = por %p63, %p64
      %p67 = scmp.ne.s32.totalorder %s50, %s66
      %p68 = scmp.eq.s32.totalorder %s21, 0
      %p69 = por %p67, %p68
      %s70 = ssub.s32 %s15, %s22
      %p71 = scmp.eq.s32.totalorder %s70, 0
      %s73 = sadd.s32 %s72, 1
      %s74 = scalar_select %p71, %s72, %s73
      %p77 = pneg %p71
      %p78 = scmp.eq.s32.totalorder %s15, 1
      %p79 = por %p77, %p78
      %p80 = scmp.ne.s32.totalorder %s72, %s75
      %p81 = scmp.eq.s32.totalorder %s15, 0
      %p82 = por %p80, %p81
      %p83 = scmp.ne.s32.totalorder %s72, %s75
      %p84 = scmp.eq.s32.totalorder %s20, 1
      %p85 = por %p83, %p84
      %p86 = scmp.ne.s32.totalorder %s75, %s76
      %p87 = scmp.eq.s32.totalorder %s20, 0
      %p88 = por %p86, %p87
      %p89 = scmp.ne.s32.totalorder %s75, %s76
      %p90 = scmp.eq.s32.totalorder %s21, 1
      %p91 = por %p89, %p90
      %p93 = scmp.ne.s32.totalorder %s76, %s92
      %p94 = scmp.eq.s32.totalorder %s21, 0
      %p95 = por %p93, %p94
      %p96 = scmp.le.s32.totalorder 1, %s15
      %p97 = scmp.lt.s32.totalorder %s15, 3
      %p98 = pnand %p96, %p97
      %p99 = pneg %p98
      // Predicated region
      $region9: #{tpu_custom_call.1} parent=5 // pred_check
        _
      $region10: #{tpu_custom_call.1} parent=5 // pred_check_branch
        %101 = sbr.rel (%p98) target = $region12
      $region11: #{tpu_custom_call.1} parent=5 // pred_region
        %s102 = ssub.s32 %s15, 1
        // Predicated region
        $region13: #{tpu_custom_call.1} parent=11 // pred_check
          %p103 = pneg %p36
        $region14: #{tpu_custom_call.1} parent=11 // pred_check_branch
          %105 = sbr.rel (%p103) target = $region16
        $region15: #{tpu_custom_call.1} parent=11 // pred_region
          %s107 = ssub.s32 128, 128
          %108 = vsyncadd [#allocation3], %s107
          %s110 = sshll.u32 [#allocation2], 4
          %s111 = int_to_ptr.vmem [resolvable:$true] %s110
          %113 = dma.hbm_to_vmem [thread:$0]  %s0, 128, %s111, [#allocation3]
        $region16: #{tpu_custom_call.1} parent=11 // pred_fallthru
          _
      $region12: #{tpu_custom_call.1} parent=5 // pred_fallthru
        _
      %p114 = scmp.lt.s32.totalorder %s15, 2
      // Predicated region
      $region17: #{tpu_custom_call.1} parent=5 // pred_check
        %p115 = pneg %p114
      $region18: #{tpu_custom_call.1} parent=5 // pred_check_branch
        %117 = sbr.rel (%p115) target = $region20
      $region19: #{tpu_custom_call.1} parent=5 // pred_region
        // Predicated region
        $region21: #{tpu_custom_call.1} parent=19 // pred_check
          %p118 = pneg %p56
        $region22: #{tpu_custom_call.1} parent=19 // pred_check_branch
          %120 = sbr.rel (%p118) target = $region24
        $region23: #{tpu_custom_call.1} parent=19 // pred_region
          %s121 = sand.u32 %s46, 1
          %s122 = scalar_lea.sflag [#allocation6], %s121
          %s123 = sand.u32 %s46, 1
          %s124 = smul.addr %s123, 152
          %s125 = scalar_lea.vmem [#allocation5], %s124
          %s127 = ssub.s32 2432, 2432
          %128 = vsyncadd %s122, %s127
          %s129 = smul.addr %s15, 19
          %s130 = smul.addr %s129, 128
          %s131 = scalar_lea.hbm %s1, %s130
          %s132 = sshll.u32 %s125, 4
          %s133 = int_to_ptr.vmem [resolvable:$true] %s132
          %138 = dma.hbm_to_vmem [thread:$0]  %s131, 2432, %s133, %s122, 128, 128, 8
        $region24: #{tpu_custom_call.1} parent=19 // pred_fallthru
          _
      $region20: #{tpu_custom_call.1} parent=5 // pred_fallthru
        _
      %p139 = scmp.le.s32.totalorder 1, %s15
      %p140 = scmp.lt.s32.totalorder %s15, 3
      %p141 = pnand %p139, %p140
      %p142 = pneg %p141
      // Predicated region
      $region25: #{tpu_custom_call.1} parent=5 // pred_check
        _
      $region26: #{tpu_custom_call.1} parent=5 // pred_check_branch
        %144 = sbr.rel (%p141) target = $region28
      $region27: #{tpu_custom_call.1} parent=5 // pred_region
        %s145 = ssub.s32 %s15, 1
        // Predicated region
        $region29: #{tpu_custom_call.1} parent=27 // pred_check
          %p146 = pneg %p36
        $region30: #{tpu_custom_call.1} parent=27 // pred_check_branch
          %148 = sbr.rel (%p146) target = $region32
        $region31: #{tpu_custom_call.1} parent=27 // pred_region
          %149 = dma.done [#allocation3], 128
        $region32: #{tpu_custom_call.1} parent=27 // pred_fallthru
          _
        %s150 = sand.u32 %s49, 1
        %s151 = scalar_lea.sflag [#allocation6], %s150
        %s152 = sand.u32 %s49, 1
        %s153 = smul.addr %s152, 152
        %s154 = scalar_lea.vmem [#allocation5], %s153
        // Predicated region
        $region33: #{tpu_custom_call.1} parent=27 // pred_check
          %p155 = pneg %p62
        $region34: #{tpu_custom_call.1} parent=27 // pred_check_branch
          %157 = sbr.rel (%p155) target = $region36
        $region35: #{tpu_custom_call.1} parent=27 // pred_region
          %158 = dma.done %s151, 2432
        $region36: #{tpu_custom_call.1} parent=27 // pred_fallthru
          _
        %p159 = pneg %p36
        %p160 = pneg %p33
        %s161 = sand.u32 %s49, 1
        %s162 = scalar_lea.sflag [#allocation6], %s161
        %s163 = sand.u32 %s49, 1
        %s164 = smul.addr %s163, 152
        %s165 = scalar_lea.vmem [#allocation5], %s164
        %p166 = pneg %p62
        %p167 = pneg %p59
        %p168 = pneg %p88
        %p169 = pneg %p85
        %s170 = sand.u32 %s75, 1
        %s171 = scalar_lea.sflag [#allocation4], %s170
        %s172 = sand.u32 %s75, 1
        %s173 = smul.addr %s172, 8
        %s174 = scalar_lea.vmem [#allocation7], %s173
        %v175 = vld [vmem:[#allocation2] sm:$0xff]
        %v176 = vld [vmem:[%s154] sm:$0xff]
        %v177 = vld [vmem:[%s154 + $0x8] sm:$0xff]
        %v178 = vld [vmem:[%s154 + $0x10] sm:$0xff]
        %v179 = vld [vmem:[%s154 + $0x18] sm:$0xff]
        %v180 = vld [vmem:[%s154 + $0x20] sm:$0xff]
        %v181 = vld [vmem:[%s154 + $0x28] sm:$0xff]
        %v182 = vld [vmem:[%s154 + $0x30] sm:$0xff]
        %v183 = vld [vmem:[%s154 + $0x38] sm:$0xff]
        %v184 = vld [vmem:[%s154 + $0x40] sm:$0xff]
        %v185 = vld [vmem:[%s154 + $0x48] sm:$0xff]
        %v186 = vld [vmem:[%s154 + $0x50] sm:$0xff]
        %v187 = vld [vmem:[%s154 + $0x58] sm:$0xff]
        %v188 = vld [vmem:[%s154 + $0x60] sm:$0xff]
        %v189 = vld [vmem:[%s154 + $0x68] sm:$0xff]
        %v190 = vld [vmem:[%s154 + $0x70] sm:$0xff]
        %v191 = vld [vmem:[%s154 + $0x78] sm:$0xff]
        %v192 = vld [vmem:[%s154 + $0x80] sm:$0xff]
        %v193 = vld [vmem:[%s154 + $0x88] sm:$0xff]
        %v194 = vld [vmem:[%s154 + $0x90] sm:$0x1]
        %v195 = vld [vmem:[%s154 + $0x91] sm:$0x1]
        %v196 = vlaneseq
        %v197 = vshrl.u32 %v196, 7
        %v198 = vsub.s32 0, %v197
        %v199 = vrot.slane %v194, %v198
        %vm200 = vcmask 130048
        %v202 = vsel %vm200, %v175, 0
        %204 = vmatprep.subr.mxu0 0.0
        %205 = vmatpush1.msra.mxu0 0.0
        %206 = vmatprep.subr.mxu0 0.0
        %207 = vmatpush1.msra.mxu0 0.0
        %208 = vmatprep.subr.mxu0 0.0
        %209 = vmatpush1.msra.mxu0 0.0
        %210 = vmatprep.subr.mxu0 0.0
        %211 = vmatpush1.msra.mxu0 0.0
        %212 = vmatprep.subr.mxu0 0.0
        %213 = vmatpush1.msra.mxu0 0.0
        %214 = vmatprep.subr.mxu0 0.0
        %215 = vmatpush1.msra.mxu0 0.0
        %216 = vmatprep.subr.mxu0 0.0
        %217 = vmatpush1.msra.mxu0 0.0
        %218 = vmatprep.subr.mxu0 0.0
        %219 = vmatpush1.msra.mxu0 0.0
        %220 = vmatprep.subr.mxu0 0.0
        %221 = vmatpush1.msra.mxu0 0.0
        %222 = vmatprep.subr.mxu0 0.0
        %223 = vmatpush1.msra.mxu0 0.0
        %224 = vmatprep.subr.mxu0 0.0
        %225 = vmatpush1.msra.mxu0 0.0
        %226 = vmatprep.subr.mxu0 0.0
        %227 = vmatpush1.msra.mxu0 0.0
        %228 = vmatprep.subr.mxu0 0.0
        %229 = vmatpush1.msra.mxu0 0.0
        %230 = vmatprep.subr.mxu0 0.0
        %231 = vmatpush1.msra.mxu0 0.0
        %232 = vmatprep.subr.mxu0 0.0
        %233 = vmatpush1.msra.mxu0 %v177
        %234 = vmatprep.subr.mxu0 0.0
        %235 = vmatpush1.msra.mxu0 %v176
        %236 = vmatprep.subr.mxu0 0.0
        %237 = vmatpush2.msra.mxu0 0.0
        %238 = vmatprep.subr.mxu0 0.0
        %239 = vmatpush2.msra.mxu0 0.0
        %240 = vmatprep.subr.mxu0 0.0
        %241 = vmatpush2.msra.mxu0 0.0
        %242 = vmatprep.subr.mxu0 0.0
        %243 = vmatpush2.msra.mxu0 0.0
        %244 = vmatprep.subr.mxu0 0.0
        %245 = vmatpush2.msra.mxu0 0.0
        %246 = vmatprep.subr.mxu0 0.0
        %247 = vmatpush2.msra.mxu0 0.0
        %248 = vmatprep.subr.mxu0 0.0
        %249 = vmatpush2.msra.mxu0 0.0
        %250 = vmatprep.subr.mxu0 0.0
        %251 = vmatpush2.msra.mxu0 0.0
        %252 = vmatprep.subr.mxu0 0.0
        %253 = vmatpush2.msra.mxu0 0.0
        %254 = vmatprep.subr.mxu0 0.0
        %255 = vmatpush2.msra.mxu0 0.0
        %256 = vmatprep.subr.mxu0 0.0
        %257 = vmatpush2.msra.mxu0 0.0
        %258 = vmatprep.subr.mxu0 0.0
        %259 = vmatpush2.msra.mxu0 0.0
        %260 = vmatprep.subr.mxu0 0.0
        %261 = vmatpush2.msra.mxu0 0.0
        %262 = vmatprep.subr.mxu0 0.0
        %263 = vmatpush2.msra.mxu0 0.0
        %264 = vmatprep.subr.mxu0 0.0
        %265 = vmatpush2.msra.mxu0 0.0
        %266 = vmatprep.subr.mxu0 0.0
        %267 = vmatpush2.msra.mxu0 0.0
        %268 = vmatprep.mubr.f32.mxu0 0.0
        %269 = vmatmul.mubr.f32.gmra.mxu0 %v202
        %v270 = vpop.f32.mrf.mxu0
        %v271 = vadd.f32 %v199, %v270
        %v272 = vpop.f32.mrf.mxu0
        %273 = vdwg.mxu0
        %v274 = vmax.f32 %v271, 0.0
        %v275 = vlaneseq
        %v276 = vshrl.u32 %v275, 7
        %v277 = vsub.s32 0, %v276
        %v278 = vrot.slane %v195, %v277
        %279 = vmatprep.subr.mxu0 0.0
        %280 = vmatpush1.msra.mxu0 %v193
        %281 = vmatprep.subr.mxu0 0.0
        %282 = vmatpush1.msra.mxu0 %v192
        %283 = vmatprep.subr.mxu0 0.0
        %284 = vmatpush1.msra.mxu0 %v191
        %285 = vmatprep.subr.mxu0 0.0
        %286 = vmatpush1.msra.mxu0 %v190
        %287 = vmatprep.subr.mxu0 0.0
        %288 = vmatpush1.msra.mxu0 %v189
        %289 = vmatprep.subr.mxu0 0.0
        %290 = vmatpush1.msra.mxu0 %v188
        %291 = vmatprep.subr.mxu0 0.0
        %292 = vmatpush1.msra.mxu0 %v187
        %293 = vmatprep.subr.mxu0 0.0
        %294 = vmatpush1.msra.mxu0 %v186
        %295 = vmatprep.subr.mxu0 0.0
        %296 = vmatpush1.msra.mxu0 %v185
        %297 = vmatprep.subr.mxu0 0.0
        %298 = vmatpush1.msra.mxu0 %v184
        %299 = vmatprep.subr.mxu0 0.0
        %300 = vmatpush1.msra.mxu0 %v183
        %301 = vmatprep.subr.mxu0 0.0
        %302 = vmatpush1.msra.mxu0 %v182
        %303 = vmatprep.subr.mxu0 0.0
        %304 = vmatpush1.msra.mxu0 %v181
        %305 = vmatprep.subr.mxu0 0.0
        %306 = vmatpush1.msra.mxu0 %v180
        %307 = vmatprep.subr.mxu0 0.0
        %308 = vmatpush1.msra.mxu0 %v179
        %309 = vmatprep.subr.mxu0 0.0
        %310 = vmatpush1.msra.mxu0 %v178
        %311 = vmatprep.subr.mxu0 0.0
        %312 = vmatpush2.msra.mxu0 0.0
        %313 = vmatprep.subr.mxu0 0.0
        %314 = vmatpush2.msra.mxu0 0.0
        %315 = vmatprep.subr.mxu0 0.0
        %316 = vmatpush2.msra.mxu0 0.0
        %317 = vmatprep.subr.mxu0 0.0
        %318 = vmatpush2.msra.mxu0 0.0
        %319 = vmatprep.subr.mxu0 0.0
        %320 = vmatpush2.msra.mxu0 0.0
        %321 = vmatprep.subr.mxu0 0.0
        %322 = vmatpush2.msra.mxu0 0.0
        %323 = vmatprep.subr.mxu0 0.0
        %324 = vmatpush2.msra.mxu0 0.0
        %325 = vmatprep.subr.mxu0 0.0
        %326 = vmatpush2.msra.mxu0 0.0
        %327 = vmatprep.subr.mxu0 0.0
        %328 = vmatpush2.msra.mxu0 0.0
        %329 = vmatprep.subr.mxu0 0.0
        %330 = vmatpush2.msra.mxu0 0.0
        %331 = vmatprep.subr.mxu0 0.0
        %332 = vmatpush2.msra.mxu0 0.0
        %333 = vmatprep.subr.mxu0 0.0
        %334 = vmatpush2.msra.mxu0 0.0
        %335 = vmatprep.subr.mxu0 0.0
        %336 = vmatpush2.msra.mxu0 0.0
        %337 = vmatprep.subr.mxu0 0.0
        %338 = vmatpush2.msra.mxu0 0.0
        %339 = vmatprep.subr.mxu0 0.0
        %340 = vmatpush2.msra.mxu0 0.0
        %341 = vmatprep.subr.mxu0 0.0
        %342 = vmatpush2.msra.mxu0 0.0
        %343 = vmatprep.mubr.f32.mxu0 0.0
        %344 = vmatmul.mubr.f32.gmra.mxu0 %v274
        %v345 = vpop.f32.mrf.mxu0
        %v346 = vadd.f32 %v278, %v345
        %v347 = vpop.f32.mrf.mxu0
        %348 = vdwg.mxu0
        %v349 = vtanh.pop %v346
        %vm350 = vcmask 261120
        %351 = vst.msk [vmem:[%s174] sm:$0xff] %vm350, %v349
        %s352 = sand.u32 %s75, 1
        %s353 = scalar_lea.sflag [#allocation4], %s352
        %s354 = sand.u32 %s75, 1
        %s355 = smul.addr %s354, 8
        %s356 = scalar_lea.vmem [#allocation7], %s355
        // Predicated region
        $region37: #{tpu_custom_call.1} parent=27 // pred_check
          %p357 = pneg %p85
        $region38: #{tpu_custom_call.1} parent=27 // pred_check_branch
          %359 = sbr.rel (%p357) target = $region40
        $region39: #{tpu_custom_call.1} parent=27 // pred_region
          %s361 = ssub.s32 128, 128
          %362 = vsyncadd %s353, %s361
          %s363 = smul.addr %s20, 128
          %s364 = scalar_lea.hbm %s2, %s363
          %s366 = sshll.u32 %s356, 4
          %s367 = int_to_ptr.vmem [resolvable:$true] %s366
          %369 = dma.vmem_to_hbm [thread:$0]  %s367, 128, %s364, %s353
        $region40: #{tpu_custom_call.1} parent=27 // pred_fallthru
          _
      $region28: #{tpu_custom_call.1} parent=5 // pred_fallthru
        _
      %p370 = scmp.le.s32.totalorder 2, %s15
      // Predicated region
      $region41: #{tpu_custom_call.1} parent=5 // pred_check
        %p371 = pneg %p370
      $region42: #{tpu_custom_call.1} parent=5 // pred_check_branch
        %373 = sbr.rel (%p371) target = $region44
      $region43: #{tpu_custom_call.1} parent=5 // pred_region
        %s374 = ssub.s32 %s15, 2
        // Predicated region
        $region45: #{tpu_custom_call.1} parent=43 // pred_check
          %p375 = pneg %p91
        $region46: #{tpu_custom_call.1} parent=43 // pred_check_branch
          %377 = sbr.rel (%p375) target = $region48
        $region47: #{tpu_custom_call.1} parent=43 // pred_region
          %s378 = sand.u32 %s76, 1
          %s379 = scalar_lea.sflag [#allocation4], %s378
          %s380 = sand.u32 %s76, 1
          %s381 = smul.addr %s380, 8
          %s382 = scalar_lea.vmem [#allocation7], %s381
          %383 = dma.done %s379, 128
        $region48: #{tpu_custom_call.1} parent=43 // pred_fallthru
          _
      $region44: #{tpu_custom_call.1} parent=5 // pred_fallthru
        _
    $region6: #{tpu_custom_call.1} parent=1 // loop_footer
      %s19 = sadd.s32 1, %s15
    $region7: #{tpu_custom_call.1} parent=1 // loop_footer_branch
      %14 = sbr.rel target = $region3
    $region8: #{tpu_custom_call.1} parent=1 // loop_exit
      _
    %384 = vsyncpa [#allocation3], 1
    %s385 = scalar_lea.sflag [#allocation3], 1
    %386 = vsyncpa %s385, 1
    %387 = vsyncpa [#allocation6], 1
    %s388 = scalar_lea.sflag [#allocation6], 1
    %389 = vsyncpa %s388, 1
    %390 = vsyncpa [#allocation4], 1
    %s391 = scalar_lea.sflag [#allocation4], 1
    %392 = vsyncpa %s391, 1

</llo_original>
